<compile_context>
chip_gen: v7x
topology: tpu7x:2x2x1
jax: 0.10.0
libtpu: 0.0.40
codegen_flags: <defaults>
</compile_context>

<pallas_src>
import functools

import jax
import jax.numpy as jnp
from jax.experimental import pallas as pl
from jax.experimental.pallas import tpu as pltpu


def _classnet_kernel(x_ref, w1_ref, b1_ref, w2_ref, b2_ref, w3_ref, b3_ref,
                     a1_ref, a2_ref, out_ref):
    # ---- embedding net: Linear(D_in, H) on MXU, f32 accumulation ----
    h = jnp.dot(x_ref[...], w1_ref[...],
                preferred_element_type=jnp.float32) + b1_ref[...]

    # ---- embedding net: PReLU (alpha scalar from SMEM) ----
    a1 = a1_ref[0, 0]
    h = jnp.where(h >= 0.0, h, a1 * h)

    # ---- embedding net: Linear(H, 2) on MXU ----
    emb = jnp.dot(h, w2_ref[...],
                  preferred_element_type=jnp.float32) + b2_ref[...]

    # ---- classification head: self.nonlinear = PReLU ----
    a2 = a2_ref[0, 0]
    emb = jnp.where(emb >= 0.0, emb, a2 * emb)

    # ---- fc1 = Linear(2, n_classes): K=2 is a pathological MXU shape,
    #      so do it as VPU broadcast-FMA instead of a padded vmatmul ----
    logits = (emb[:, 0:1] * w3_ref[0:1, :]
              + emb[:, 1:2] * w3_ref[1:2, :]
              + b3_ref[...])

    # ---- log_softmax(dim=-1), numerically stable, f32 throughout ----
    m = jnp.max(logits, axis=-1, keepdims=True)
    z = logits - m
    lse = jnp.log(jnp.sum(jnp.exp(z), axis=-1, keepdims=True))
    out_ref[...] = z - lse


@functools.partial(jax.jit, static_argnames=("block_b",))
def classification_net_mine(x_nchw, params, block_b=2048):
    """x_nchw: [B, C, H, W] float32. Returns log-probs [B, n_classes]."""
    B = x_nchw.shape[0]
    x_flat = x_nchw.reshape(B, -1)
    d_in = x_flat.shape[1]
    hidden = params["w1"].shape[1]
    n_classes = params["w3"].shape[1]

    # bf16 storage for the HBM-bound operand (x) and its weight; accumulation
    # inside the kernel stays f32, as does all post-matmul elementwise math.
    x_bf = x_flat.astype(jnp.bfloat16)
    w1_bf = params["w1"].astype(jnp.bfloat16)

    # Batch tiling: sublane-align B, clamp the tile to the (padded) batch,
    # and pad the batch to a multiple of the tile.
    b_sub = ((B + 7) // 8) * 8
    blk = max(8, min(block_b, b_sub))
    b_pad = ((b_sub + blk - 1) // blk) * blk
    if b_pad != B:
        x_bf = jnp.pad(x_bf, ((0, b_pad - B), (0, 0)))
    grid = (b_pad // blk,)

    smem = pl.BlockSpec(memory_space=pltpu.MemorySpace.SMEM)

    out = pl.pallas_call(
        _classnet_kernel,
        out_shape=jax.ShapeDtypeStruct((b_pad, n_classes), jnp.float32),
        grid=grid,
        in_specs=[
            # x: tiled over the batch grid (only per-step HBM traffic)
            pl.BlockSpec((blk, d_in), lambda i: (i, 0)),
            # weights/biases: constant index_map -> fetched once, resident
            pl.BlockSpec((d_in, hidden), lambda i: (0, 0)),
            pl.BlockSpec((1, hidden), lambda i: (0, 0)),
            pl.BlockSpec((hidden, 2), lambda i: (0, 0)),
            pl.BlockSpec((1, 2), lambda i: (0, 0)),
            pl.BlockSpec((2, n_classes), lambda i: (0, 0)),
            pl.BlockSpec((1, n_classes), lambda i: (0, 0)),
            # PReLU alphas: scalars on the scalar path
            smem,
            smem,
        ],
        out_specs=pl.BlockSpec((blk, n_classes), lambda i: (i, 0)),
        compiler_params=pltpu.CompilerParams(
            dimension_semantics=("parallel",),
        ),
    )(x_bf, w1_bf, params["b1"], params["w2"], params["b2"],
      params["w3"], params["b3"], params["alpha1"], params["alpha_head"])

    return out[:B]


def init_params(key, d_in, hidden, n_classes):
    ks = jax.random.split(key, 6)
    # deterministic small-scale init (synthetic weights, not a checkpoint)
    w1 = jax.random.normal(ks[0], (d_in, hidden), jnp.float32) * 0.02
    b1 = jax.random.normal(ks[1], (1, hidden), jnp.float32) * 0.01
    w2 = jax.random.normal(ks[2], (hidden, 2), jnp.float32) * 0.1
    b2 = jax.random.normal(ks[3], (1, 2), jnp.float32) * 0.01
    w3 = jax.random.normal(ks[4], (2, n_classes), jnp.float32) * 0.5
    b3 = jax.random.normal(ks[5], (1, n_classes), jnp.float32) * 0.01
    # PyTorch nn.PReLU() default: single learnable alpha = 0.25
    alpha1 = jnp.full((1, 1), 0.25, jnp.float32)       # embedding-net PReLU
    alpha_head = jnp.full((1, 1), 0.25, jnp.float32)   # self.nonlinear PReLU
    return dict(w1=w1, b1=b1, alpha1=alpha1,
                w2=w2, b2=b2, alpha_head=alpha_head,
                w3=w3, b3=b3)


def _reference(x_nchw, p, bf16_inputs):
    x = x_nchw.reshape(x_nchw.shape[0], -1)
    w1 = p["w1"]
    if bf16_inputs:
        x = x.astype(jnp.bfloat16).astype(jnp.float32)
        w1 = w1.astype(jnp.bfloat16).astype(jnp.float32)
    h = x @ w1 + p["b1"]
    h = jnp.where(h >= 0, h, p["alpha1"][0, 0] * h)
    e = h @ p["w2"] + p["b2"]
    e = jnp.where(e >= 0, e, p["alpha_head"][0, 0] * e)
    logits = e @ p["w3"] + p["b3"]
    return jax.nn.log_softmax(logits, axis=-1)


if __name__ == "__main__":
    key = jax.random.PRNGKey(0)
    kx, kp = jax.random.split(key)

    B, C, H, W = 2, 4, 16, 16
    hidden, n_classes = 32, 8
    d_in = C * H * W

    x = jax.random.normal(kx, (B, C, H, W), jnp.float32)
    params = init_params(kp, d_in, hidden, n_classes)

    scores = classification_net_mine(x, params)
    scores = jax.block_until_ready(scores)
    assert scores.shape == (B, n_classes)

    # Tight check against a reference using the same bf16 input rounding.
    ref_bf16 = _reference(x, params, bf16_inputs=True)
    assert jnp.allclose(scores, ref_bf16, atol=2e-4, rtol=2e-4)

    # Loose sanity check against the full-f32 reference (bf16 storage error).
    ref_f32 = _reference(x, params, bf16_inputs=False)
    assert jnp.allclose(scores, ref_f32, atol=5e-2, rtol=5e-2)

    print("KERNEL_OK")
</pallas_src>

<mosaic_0001>
module attributes {stable_mosaic.version = 11 : i64} {
  func.func @_classnet_kernel(%arg0: i32, %arg1: memref<8x1024xbf16, #tpu.memory_space<vmem>>, %arg2: memref<1024x32xbf16, #tpu.memory_space<vmem>>, %arg3: memref<1x32xf32, #tpu.memory_space<vmem>>, %arg4: memref<32x2xf32, #tpu.memory_space<vmem>>, %arg5: memref<1x2xf32, #tpu.memory_space<vmem>>, %arg6: memref<2x8xf32, #tpu.memory_space<vmem>>, %arg7: memref<1x8xf32, #tpu.memory_space<vmem>>, %arg8: memref<1x1xf32, #tpu.memory_space<smem>>, %arg9: memref<1x1xf32, #tpu.memory_space<smem>>, %arg10: memref<8x8xf32, #tpu.memory_space<vmem>>) attributes {dimension_semantics = [#tpu.dimension_semantics<parallel>], iteration_bounds = array<i64: 1>, scalar_prefetch = 0 : i64, scratch_operands = 0 : i64, tpu.core_type = #tpu.core_type<tc>, window_params = [{transform_indices = @transform_0, window_bounds = array<i64: 8, 1024>}, {pipeline_mode = #tpu.pipeline_mode<synchronous>, transform_indices = @transform_1, window_bounds = array<i64: 1024, 32>}, {pipeline_mode = #tpu.pipeline_mode<synchronous>, transform_indices = @transform_2, window_bounds = array<i64: 1, 32>}, {pipeline_mode = #tpu.pipeline_mode<synchronous>, transform_indices = @transform_3, window_bounds = array<i64: 32, 2>}, {pipeline_mode = #tpu.pipeline_mode<synchronous>, transform_indices = @transform_4, window_bounds = array<i64: 1, 2>}, {pipeline_mode = #tpu.pipeline_mode<synchronous>, transform_indices = @transform_5, window_bounds = array<i64: 2, 8>}, {pipeline_mode = #tpu.pipeline_mode<synchronous>, transform_indices = @transform_6, window_bounds = array<i64: 1, 8>}, {transform_indices = @transform_7, window_bounds = array<i64: 1, 1>}, {transform_indices = @transform_8, window_bounds = array<i64: 1, 1>}, {transform_indices = @transform_9, window_bounds = array<i64: 8, 8>}]} {
    %c0 = arith.constant 0 : index
    %c0_0 = arith.constant 0 : index
    %0 = vector.load %arg1[%c0, %c0_0] : memref<8x1024xbf16, #tpu.memory_space<vmem>>, vector<8x1024xbf16>
    %c0_1 = arith.constant 0 : index
    %c0_2 = arith.constant 0 : index
    %1 = vector.load %arg2[%c0_1, %c0_2] : memref<1024x32xbf16, #tpu.memory_space<vmem>>, vector<1024x32xbf16>
    %cst = arith.constant dense<0.000000e+00> : vector<8x32xf32>
    %2 = tpu.matmul %0, %1, %cst {dimension_numbers = #tpu.dot_dimension_numbers<[1], [0], [0], [1], [0, 0, 1, 1], [], []>} : vector<8x1024xbf16>, vector<1024x32xbf16>, vector<8x32xf32> -> vector<8x32xf32>
    %c0_3 = arith.constant 0 : index
    %c0_4 = arith.constant 0 : index
    %3 = vector.load %arg3[%c0_3, %c0_4] : memref<1x32xf32, #tpu.memory_space<vmem>>, vector<1x32xf32>
    %4 = vector.broadcast %3 : vector<1x32xf32> to vector<8x32xf32>
    %5 = arith.addf %2, %4 : vector<8x32xf32>
    %c0_5 = arith.constant 0 : index
    %c0_6 = arith.constant 0 : index
    %6 = memref.load %arg8[%c0_5, %c0_6] : memref<1x1xf32, #tpu.memory_space<smem>>
    %cst_7 = arith.constant 0.000000e+00 : f32
    %7 = vector.broadcast %cst_7 : f32 to vector<8x32xf32>
    %8 = arith.cmpf oge, %5, %7 : vector<8x32xf32>
    %9 = vector.broadcast %6 : f32 to vector<8x32xf32>
    %10 = arith.mulf %9, %5 : vector<8x32xf32>
    %11 = arith.select %8, %5, %10 : vector<8x32xi1>, vector<8x32xf32>
    %c0_8 = arith.constant 0 : index
    %c0_9 = arith.constant 0 : index
    %12 = vector.load %arg4[%c0_8, %c0_9] : memref<32x2xf32, #tpu.memory_space<vmem>>, vector<32x2xf32>
    %cst_10 = arith.constant dense<0.000000e+00> : vector<8x2xf32>
    %13 = tpu.matmul %11, %12, %cst_10 {dimension_numbers = #tpu.dot_dimension_numbers<[1], [0], [0], [1], [0, 0, 1, 1], [], []>} : vector<8x32xf32>, vector<32x2xf32>, vector<8x2xf32> -> vector<8x2xf32>
    %c0_11 = arith.constant 0 : index
    %c0_12 = arith.constant 0 : index
    %14 = vector.load %arg5[%c0_11, %c0_12] : memref<1x2xf32, #tpu.memory_space<vmem>>, vector<1x2xf32>
    %15 = vector.broadcast %14 : vector<1x2xf32> to vector<8x2xf32>
    %16 = arith.addf %13, %15 : vector<8x2xf32>
    %c0_13 = arith.constant 0 : index
    %c0_14 = arith.constant 0 : index
    %17 = memref.load %arg9[%c0_13, %c0_14] : memref<1x1xf32, #tpu.memory_space<smem>>
    %cst_15 = arith.constant 0.000000e+00 : f32
    %18 = vector.broadcast %cst_15 : f32 to vector<8x2xf32>
    %19 = arith.cmpf oge, %16, %18 : vector<8x2xf32>
    %20 = vector.broadcast %17 : f32 to vector<8x2xf32>
    %21 = arith.mulf %20, %16 : vector<8x2xf32>
    %22 = arith.select %19, %16, %21 : vector<8x2xi1>, vector<8x2xf32>
    %23 = vector.extract_strided_slice %22 {offsets = [0, 0], sizes = [8, 1], strides = [1, 1]} : vector<8x2xf32> to vector<8x1xf32>
    %c0_16 = arith.constant 0 : index
    %c0_17 = arith.constant 0 : index
    %24 = vector.load %arg6[%c0_16, %c0_17] : memref<2x8xf32, #tpu.memory_space<vmem>>, vector<1x8xf32>
    %25 = vector.broadcast %23 : vector<8x1xf32> to vector<8x8xf32>
    %26 = vector.broadcast %24 : vector<1x8xf32> to vector<8x8xf32>
    %27 = arith.mulf %25, %26 : vector<8x8xf32>
    %28 = vector.extract_strided_slice %22 {offsets = [0, 1], sizes = [8, 1], strides = [1, 1]} : vector<8x2xf32> to vector<8x1xf32>
    %c1 = arith.constant 1 : index
    %c0_18 = arith.constant 0 : index
    %29 = vector.load %arg6[%c1, %c0_18] : memref<2x8xf32, #tpu.memory_space<vmem>>, vector<1x8xf32>
    %30 = vector.broadcast %28 : vector<8x1xf32> to vector<8x8xf32>
    %31 = vector.broadcast %29 : vector<1x8xf32> to vector<8x8xf32>
    %32 = arith.mulf %30, %31 : vector<8x8xf32>
    %33 = arith.addf %27, %32 : vector<8x8xf32>
    %c0_19 = arith.constant 0 : index
    %c0_20 = arith.constant 0 : index
    %34 = vector.load %arg7[%c0_19, %c0_20] : memref<1x8xf32, #tpu.memory_space<vmem>>, vector<1x8xf32>
    %35 = vector.broadcast %34 : vector<1x8xf32> to vector<8x8xf32>
    %36 = arith.addf %33, %35 : vector<8x8xf32>
    %cst_21 = arith.constant dense<0xFF800000> : vector<8xf32>
    %37 = vector.multi_reduction <maximumf>, %36, %cst_21 [1] : vector<8x8xf32> to vector<8xf32>
    %38 = vector.shape_cast %37 : vector<8xf32> to vector<8x1xf32>
    %39 = vector.broadcast %38 : vector<8x1xf32> to vector<8x8xf32>
    %40 = arith.subf %36, %39 : vector<8x8xf32>
    %41 = math.exp %40 : vector<8x8xf32>
    %cst_22 = arith.constant dense<0.000000e+00> : vector<8xf32>
    %42 = vector.multi_reduction <add>, %41, %cst_22 [1] : vector<8x8xf32> to vector<8xf32>
    %43 = vector.shape_cast %42 : vector<8xf32> to vector<8x1xf32>
    %44 = math.log %43 : vector<8x1xf32>
    %45 = vector.broadcast %44 : vector<8x1xf32> to vector<8x8xf32>
    %46 = arith.subf %40, %45 : vector<8x8xf32>
    %c0_23 = arith.constant 0 : index
    %c0_24 = arith.constant 0 : index
    %47 = vector.load %arg10[%c0_23, %c0_24] : memref<8x8xf32, #tpu.memory_space<vmem>>, vector<8x8xf32>
    tpu.vector_store %arg10[%c0_23, %c0_24], %46 {strides = array<i32>} : memref<8x8xf32, #tpu.memory_space<vmem>>, vector<8x8xf32>,
    return
  }
  func.func @transform_0(%arg0: i32) -> (i32, i32) {
    %c0_i32 = arith.constant 0 : i32
    %c0_i32_0 = arith.constant 0 : i32
    return %arg0, %c0_i32 : i32, i32
  }
  func.func @transform_1(%arg0: i32) -> (i32, i32) {
    %c0_i32 = arith.constant 0 : i32
    %c0_i32_0 = arith.constant 0 : i32
    %c0_i32_1 = arith.constant 0 : i32
    return %c0_i32, %c0_i32_0 : i32, i32
  }
  func.func @transform_2(%arg0: i32) -> (i32, i32) {
    %c0_i32 = arith.constant 0 : i32
    %c0_i32_0 = arith.constant 0 : i32
    %c0_i32_1 = arith.constant 0 : i32
    return %c0_i32, %c0_i32_0 : i32, i32
  }
  func.func @transform_3(%arg0: i32) -> (i32, i32) {
    %c0_i32 = arith.constant 0 : i32
    %c0_i32_0 = arith.constant 0 : i32
    %c0_i32_1 = arith.constant 0 : i32
    return %c0_i32, %c0_i32_0 : i32, i32
  }
  func.func @transform_4(%arg0: i32) -> (i32, i32) {
    %c0_i32 = arith.constant 0 : i32
    %c0_i32_0 = arith.constant 0 : i32
    %c0_i32_1 = arith.constant 0 : i32
    return %c0_i32, %c0_i32_0 : i32, i32
  }
  func.func @transform_5(%arg0: i32) -> (i32, i32) {
    %c0_i32 = arith.constant 0 : i32
    %c0_i32_0 = arith.constant 0 : i32
    %c0_i32_1 = arith.constant 0 : i32
    return %c0_i32, %c0_i32_0 : i32, i32
  }
  func.func @transform_6(%arg0: i32) -> (i32, i32) {
    %c0_i32 = arith.constant 0 : i32
    %c0_i32_0 = arith.constant 0 : i32
    %c0_i32_1 = arith.constant 0 : i32
    return %c0_i32, %c0_i32_0 : i32, i32
  }
  func.func @transform_7(%arg0: i32) -> (i32, i32) {
    %c0_i32 = arith.constant 0 : i32
    %c0_i32_0 = arith.constant 0 : i32
    %c0_i32_1 = arith.constant 0 : i32
    return %c0_i32, %c0_i32_0 : i32, i32
  }
  func.func @transform_8(%arg0: i32) -> (i32, i32) {
    %c0_i32 = arith.constant 0 : i32
    %c0_i32_0 = arith.constant 0 : i32
    %c0_i32_1 = arith.constant 0 : i32
    return %c0_i32, %c0_i32_0 : i32, i32
  }
  func.func @transform_9(%arg0: i32) -> (i32, i32) {
    %c0_i32 = arith.constant 0 : i32
    %c0_i32_0 = arith.constant 0 : i32
    return %arg0, %c0_i32 : i32, i32
  }
}

</mosaic_0001>

<llo_original>
// kernel: classification_net_mine.1
$region0: #{classification_net_mine.1}
  #allocation0 [shape = 'u32[]', space=smem, size = 0x4, offset = 0x4, fixed_abs, tag = 'smem constant byte address 0x4 - core index']
  #allocation1 [shape = 'u32[144,128]{1,0:T(1,128)}', space=vmem, size = 0x12000, scoped, tag = 'internal scratch']
  #allocation2 [shape = 'f32[1,1]{1,0:T(1,128)S(6)}', space=smem, size = 0x200, scoped, tag = 'scoped memory for classification_net_mine.1']
  #allocation3 [shape = 'f32[1,1]{1,0:T(1,128)S(6)}', space=smem, size = 0x200, scoped, tag = 'scoped memory for classification_net_mine.1']
  %s0 = inlined_call_operand.vmem [shape: bf16[8,1024], index: 0, kind: input, shape index: {}]
  %s1 = inlined_call_operand.vmem [shape: bf16[1024,32], index: 1, kind: input, shape index: {}]
  %s2 = inlined_call_operand.vmem [shape: f32[1,32], index: 2, kind: input, shape index: {}]
  %s3 = inlined_call_operand.vmem [shape: f32[32,2], index: 3, kind: input, shape index: {}]
  %s4 = inlined_call_operand.vmem [shape: f32[1,2], index: 4, kind: input, shape index: {}]
  %s5 = inlined_call_operand.vmem [shape: f32[2,8], index: 5, kind: input, shape index: {}]
  %s6 = inlined_call_operand.vmem [shape: f32[1,8], index: 6, kind: input, shape index: {}]
  %s7 = inlined_call_operand.<no memory space> [shape: f32[1,1], index: 7, kind: input, shape index: {}]
  %s8 = inlined_call_operand.<no memory space> [shape: f32[1,1], index: 8, kind: input, shape index: {}]
  %s9 = inlined_call_operand.vmem [shape: f32[8,8], index: 9, kind: output, shape index: {}]
  %s10 = sld [smem:[#allocation0]]
  $region46: #{classification_net_mine.1} parent=0
    _
  %s12 = ssub.s32 1, %s10
  %s13 = scalar_select 0, %s12, %s10
  %14 = sst [smem:[#allocation2]] %s7
  %15 = sst [smem:[#allocation3]] %s8
  // Predicated region
  $region2: #{classification_net_mine.1} parent=0 // pred_check
    _
  $region3: #{classification_net_mine.1} parent=0 // pred_check_branch
    %17 = sbr.rel (0) target = $region5
  $region4: #{classification_net_mine.1} parent=0 // pred_region
    _
  $region5: #{classification_net_mine.1} parent=0 // pred_fallthru
    _
  // Predicated region
  $region6: #{classification_net_mine.1} parent=0 // pred_check
    _
  $region7: #{classification_net_mine.1} parent=0 // pred_check_branch
    %19 = sbr.rel (0) target = $region9
  $region8: #{classification_net_mine.1} parent=0 // pred_region
    _
  $region9: #{classification_net_mine.1} parent=0 // pred_fallthru
    _
  // Predicated region
  $region10: #{classification_net_mine.1} parent=0 // pred_check
    _
  $region11: #{classification_net_mine.1} parent=0 // pred_check_branch
    %21 = sbr.rel (0) target = $region13
  $region12: #{classification_net_mine.1} parent=0 // pred_region
    _
  $region13: #{classification_net_mine.1} parent=0 // pred_fallthru
    _
  // Predicated region
  $region14: #{classification_net_mine.1} parent=0 // pred_check
    _
  $region15: #{classification_net_mine.1} parent=0 // pred_check_branch
    %23 = sbr.rel (0) target = $region17
  $region16: #{classification_net_mine.1} parent=0 // pred_region
    _
  $region17: #{classification_net_mine.1} parent=0 // pred_fallthru
    _
  // Predicated region
  $region18: #{classification_net_mine.1} parent=0 // pred_check
    _
  $region19: #{classification_net_mine.1} parent=0 // pred_check_branch
    %25 = sbr.rel (0) target = $region21
  $region20: #{classification_net_mine.1} parent=0 // pred_region
    _
  $region21: #{classification_net_mine.1} parent=0 // pred_fallthru
    _
  // Predicated region
  $region22: #{classification_net_mine.1} parent=0 // pred_check
    _
  $region23: #{classification_net_mine.1} parent=0 // pred_check_branch
    %27 = sbr.rel (0) target = $region25
  $region24: #{classification_net_mine.1} parent=0 // pred_region
    _
  $region25: #{classification_net_mine.1} parent=0 // pred_fallthru
    _
  // Predicated region
  $region26: #{classification_net_mine.1} parent=0 // pred_check
    _
  $region27: #{classification_net_mine.1} parent=0 // pred_check_branch
    %29 = sbr.rel (0) target = $region29
  $region28: #{classification_net_mine.1} parent=0 // pred_region
    _
  $region29: #{classification_net_mine.1} parent=0 // pred_fallthru
    _
  // Predicated region
  $region30: #{classification_net_mine.1} parent=0 // pred_check
    _
  $region31: #{classification_net_mine.1} parent=0 // pred_check_branch
    %31 = sbr.rel (0) target = $region33
  $region32: #{classification_net_mine.1} parent=0 // pred_region
    _
  $region33: #{classification_net_mine.1} parent=0 // pred_fallthru
    _
  // Predicated region
  $region34: #{classification_net_mine.1} parent=0 // pred_check
    _
  $region35: #{classification_net_mine.1} parent=0 // pred_check_branch
    %33 = sbr.rel (0) target = $region37
  $region36: #{classification_net_mine.1} parent=0 // pred_region
    _
  $region37: #{classification_net_mine.1} parent=0 // pred_fallthru
    _
  %v35 = vld [vmem:[%s0] sm:$0xff]
  %v36 = vld [vmem:[%s0 + $0x8] sm:$0xff]
  %v37 = vld [vmem:[%s0 + $0x10] sm:$0xff]
  %v38 = vld [vmem:[%s0 + $0x18] sm:$0xff]
  %v39 = vld [vmem:[%s1] sm:$0xf]
  %v40 = vld [vmem:[%s1 + $0x4] sm:$0xf]
  %v41 = vld [vmem:[%s1 + $0x8] sm:$0xf]
  %v42 = vld [vmem:[%s1 + $0xc] sm:$0xf]
  %v43 = vld [vmem:[%s1 + $0x10] sm:$0xf]
  %v44 = vld [vmem:[%s1 + $0x14] sm:$0xf]
  %v45 = vld [vmem:[%s1 + $0x18] sm:$0xf]
  %v46 = vld [vmem:[%s1 + $0x1c] sm:$0xf]
  %v47 = vld [vmem:[%s1 + $0x20] sm:$0xf]
  %v48 = vld [vmem:[%s1 + $0x24] sm:$0xf]
  %v49 = vld [vmem:[%s1 + $0x28] sm:$0xf]
  %v50 = vld [vmem:[%s1 + $0x2c] sm:$0xf]
  %v51 = vld [vmem:[%s1 + $0x30] sm:$0xf]
  %v52 = vld [vmem:[%s1 + $0x34] sm:$0xf]
  %v53 = vld [vmem:[%s1 + $0x38] sm:$0xf]
  %v54 = vld [vmem:[%s1 + $0x3c] sm:$0xf]
  %v55 = vld [vmem:[%s1 + $0x40] sm:$0xf]
  %v56 = vld [vmem:[%s1 + $0x44] sm:$0xf]
  %v57 = vld [vmem:[%s1 + $0x48] sm:$0xf]
  %v58 = vld [vmem:[%s1 + $0x4c] sm:$0xf]
  %v59 = vld [vmem:[%s1 + $0x50] sm:$0xf]
  %v60 = vld [vmem:[%s1 + $0x54] sm:$0xf]
  %v61 = vld [vmem:[%s1 + $0x58] sm:$0xf]
  %v62 = vld [vmem:[%s1 + $0x5c] sm:$0xf]
  %v63 = vld [vmem:[%s1 + $0x60] sm:$0xf]
  %v64 = vld [vmem:[%s1 + $0x64] sm:$0xf]
  %v65 = vld [vmem:[%s1 + $0x68] sm:$0xf]
  %v66 = vld [vmem:[%s1 + $0x6c] sm:$0xf]
  %v67 = vld [vmem:[%s1 + $0x70] sm:$0xf]
  %v68 = vld [vmem:[%s1 + $0x74] sm:$0xf]
  %v69 = vld [vmem:[%s1 + $0x78] sm:$0xf]
  %v70 = vld [vmem:[%s1 + $0x7c] sm:$0xf]
  %v71 = vld [vmem:[%s1 + $0x80] sm:$0xf]
  %v72 = vld [vmem:[%s1 + $0x84] sm:$0xf]
  %v73 = vld [vmem:[%s1 + $0x88] sm:$0xf]
  %v74 = vld [vmem:[%s1 + $0x8c] sm:$0xf]
  %v75 = vld [vmem:[%s1 + $0x90] sm:$0xf]
  %v76 = vld [vmem:[%s1 + $0x94] sm:$0xf]
  %v77 = vld [vmem:[%s1 + $0x98] sm:$0xf]
  %v78 = vld [vmem:[%s1 + $0x9c] sm:$0xf]
  %v79 = vld [vmem:[%s1 + $0xa0] sm:$0xf]
  %v80 = vld [vmem:[%s1 + $0xa4] sm:$0xf]
  %v81 = vld [vmem:[%s1 + $0xa8] sm:$0xf]
  %v82 = vld [vmem:[%s1 + $0xac] sm:$0xf]
  %v83 = vld [vmem:[%s1 + $0xb0] sm:$0xf]
  %v84 = vld [vmem:[%s1 + $0xb4] sm:$0xf]
  %v85 = vld [vmem:[%s1 + $0xb8] sm:$0xf]
  %v86 = vld [vmem:[%s1 + $0xbc] sm:$0xf]
  %v87 = vld [vmem:[%s1 + $0xc0] sm:$0xf]
  %v88 = vld [vmem:[%s1 + $0xc4] sm:$0xf]
  %v89 = vld [vmem:[%s1 + $0xc8] sm:$0xf]
  %v90 = vld [vmem:[%s1 + $0xcc] sm:$0xf]
  %v91 = vld [vmem:[%s1 + $0xd0] sm:$0xf]
  %v92 = vld [vmem:[%s1 + $0xd4] sm:$0xf]
  %v93 = vld [vmem:[%s1 + $0xd8] sm:$0xf]
  %v94 = vld [vmem:[%s1 + $0xdc] sm:$0xf]
  %v95 = vld [vmem:[%s1 + $0xe0] sm:$0xf]
  %v96 = vld [vmem:[%s1 + $0xe4] sm:$0xf]
  %v97 = vld [vmem:[%s1 + $0xe8] sm:$0xf]
  %v98 = vld [vmem:[%s1 + $0xec] sm:$0xf]
  %v99 = vld [vmem:[%s1 + $0xf0] sm:$0xf]
  %v100 = vld [vmem:[%s1 + $0xf4] sm:$0xf]
  %v101 = vld [vmem:[%s1 + $0xf8] sm:$0xf]
  %v102 = vld [vmem:[%s1 + $0xfc] sm:$0xf]
  %v103 = vld [vmem:[%s1 + $0x100] sm:$0xf]
  %v104 = vld [vmem:[%s1 + $0x104] sm:$0xf]
  %v105 = vld [vmem:[%s1 + $0x108] sm:$0xf]
  %v106 = vld [vmem:[%s1 + $0x10c] sm:$0xf]
  %v107 = vld [vmem:[%s1 + $0x110] sm:$0xf]
  %v108 = vld [vmem:[%s1 + $0x114] sm:$0xf]
  %v109 = vld [vmem:[%s1 + $0x118] sm:$0xf]
  %v110 = vld [vmem:[%s1 + $0x11c] sm:$0xf]
  %v111 = vld [vmem:[%s1 + $0x120] sm:$0xf]
  %v112 = vld [vmem:[%s1 + $0x124] sm:$0xf]
  %v113 = vld [vmem:[%s1 + $0x128] sm:$0xf]
  %v114 = vld [vmem:[%s1 + $0x12c] sm:$0xf]
  %v115 = vld [vmem:[%s1 + $0x130] sm:$0xf]
  %v116 = vld [vmem:[%s1 + $0x134] sm:$0xf]
  %v117 = vld [vmem:[%s1 + $0x138] sm:$0xf]
  %v118 = vld [vmem:[%s1 + $0x13c] sm:$0xf]
  %v119 = vld [vmem:[%s1 + $0x140] sm:$0xf]
  %v120 = vld [vmem:[%s1 + $0x144] sm:$0xf]
  %v121 = vld [vmem:[%s1 + $0x148] sm:$0xf]
  %v122 = vld [vmem:[%s1 + $0x14c] sm:$0xf]
  %v123 = vld [vmem:[%s1 + $0x150] sm:$0xf]
  %v124 = vld [vmem:[%s1 + $0x154] sm:$0xf]
  %v125 = vld [vmem:[%s1 + $0x158] sm:$0xf]
  %v126 = vld [vmem:[%s1 + $0x15c] sm:$0xf]
  %v127 = vld [vmem:[%s1 + $0x160] sm:$0xf]
  %v128 = vld [vmem:[%s1 + $0x164] sm:$0xf]
  %v129 = vld [vmem:[%s1 + $0x168] sm:$0xf]
  %v130 = vld [vmem:[%s1 + $0x16c] sm:$0xf]
  %v131 = vld [vmem:[%s1 + $0x170] sm:$0xf]
  %v132 = vld [vmem:[%s1 + $0x174] sm:$0xf]
  %v133 = vld [vmem:[%s1 + $0x178] sm:$0xf]
  %v134 = vld [vmem:[%s1 + $0x17c] sm:$0xf]
  %v135 = vld [vmem:[%s1 + $0x180] sm:$0xf]
  %v136 = vld [vmem:[%s1 + $0x184] sm:$0xf]
  %v137 = vld [vmem:[%s1 + $0x188] sm:$0xf]
  %v138 = vld [vmem:[%s1 + $0x18c] sm:$0xf]
  %v139 = vld [vmem:[%s1 + $0x190] sm:$0xf]
  %v140 = vld [vmem:[%s1 + $0x194] sm:$0xf]
  %v141 = vld [vmem:[%s1 + $0x198] sm:$0xf]
  %v142 = vld [vmem:[%s1 + $0x19c] sm:$0xf]
  %v143 = vld [vmem:[%s1 + $0x1a0] sm:$0xf]
  %v144 = vld [vmem:[%s1 + $0x1a4] sm:$0xf]
  %v145 = vld [vmem:[%s1 + $0x1a8] sm:$0xf]
  %v146 = vld [vmem:[%s1 + $0x1ac] sm:$0xf]
  %v147 = vld [vmem:[%s1 + $0x1b0] sm:$0xf]
  %v148 = vld [vmem:[%s1 + $0x1b4] sm:$0xf]
  %v149 = vld [vmem:[%s1 + $0x1b8] sm:$0xf]
  %v150 = vld [vmem:[%s1 + $0x1bc] sm:$0xf]
  %v151 = vld [vmem:[%s1 + $0x1c0] sm:$0xf]
  %v152 = vld [vmem:[%s1 + $0x1c4] sm:$0xf]
  %v153 = vld [vmem:[%s1 + $0x1c8] sm:$0xf]
  %v154 = vld [vmem:[%s1 + $0x1cc] sm:$0xf]
  %v155 = vld [vmem:[%s1 + $0x1d0] sm:$0xf]
  %v156 = vld [vmem:[%s1 + $0x1d4] sm:$0xf]
  %v157 = vld [vmem:[%s1 + $0x1d8] sm:$0xf]
  %v158 = vld [vmem:[%s1 + $0x1dc] sm:$0xf]
  %v159 = vld [vmem:[%s1 + $0x1e0] sm:$0xf]
  %v160 = vld [vmem:[%s1 + $0x1e4] sm:$0xf]
  %v161 = vld [vmem:[%s1 + $0x1e8] sm:$0xf]
  %v162 = vld [vmem:[%s1 + $0x1ec] sm:$0xf]
  %v163 = vld [vmem:[%s1 + $0x1f0] sm:$0xf]
  %v164 = vld [vmem:[%s1 + $0x1f4] sm:$0xf]
  %v165 = vld [vmem:[%s1 + $0x1f8] sm:$0xf]
  %v166 = vld [vmem:[%s1 + $0x1fc] sm:$0xf]
  %v167 = vld [vmem:[%s2] sm:$0x1]
  %v169 = vlaneseq
  %v170 = vshrl.u32 %v169, 7
  %v171 = vsub.s32 0, %v170
  %v172 = vrot.slane %v167, %v171
  %v178 = vunpack.c.l.b16 %v35
  %v179 = vunpack.c.h.b16 %v35
  %v180 = vunpack.c.l.b16 %v36
  %v181 = vunpack.c.h.b16 %v36
  %v182 = vunpack.c.l.b16 %v37
  %v183 = vunpack.c.h.b16 %v37
  %v184 = vunpack.c.l.b16 %v38
  %v185 = vunpack.c.h.b16 %v38
  %v186 = vpack.c.b16 %v178, %v178
  %v187 = vpack.c.b16 %v179, %v179
  %v188 = vpack.c.b16 %v180, %v180
  %v189 = vpack.c.b16 %v181, %v181
  %v190 = vpack.c.b16 %v182, %v182
  %v191 = vpack.c.b16 %v183, %v183
  %v192 = vpack.c.b16 %v184, %v184
  %v193 = vpack.c.b16 %v185, %v185
  %v330 = vunpack.c.l.b16 %v39
  %v331 = vunpack.c.l.b16 %v40
  %v332 = vunpack.c.l.b16 %v41
  %v333 = vunpack.c.l.b16 %v42
  %v334 = vunpack.c.l.b16 %v43
  %v335 = vunpack.c.l.b16 %v44
  %v336 = vunpack.c.l.b16 %v45
  %v337 = vunpack.c.l.b16 %v46
  %v338 = vunpack.c.l.b16 %v47
  %v339 = vunpack.c.l.b16 %v48
  %v340 = vunpack.c.l.b16 %v49
  %v341 = vunpack.c.l.b16 %v50
  %v342 = vunpack.c.l.b16 %v51
  %v343 = vunpack.c.l.b16 %v52
  %v344 = vunpack.c.l.b16 %v53
  %v345 = vunpack.c.l.b16 %v54
  %v346 = vunpack.c.l.b16 %v55
  %v347 = vunpack.c.l.b16 %v56
  %v348 = vunpack.c.l.b16 %v57
  %v349 = vunpack.c.l.b16 %v58
  %v350 = vunpack.c.l.b16 %v59
  %v351 = vunpack.c.l.b16 %v60
  %v352 = vunpack.c.l.b16 %v61
  %v353 = vunpack.c.l.b16 %v62
  %v354 = vunpack.c.l.b16 %v63
  %v355 = vunpack.c.l.b16 %v64
  %v356 = vunpack.c.l.b16 %v65
  %v357 = vunpack.c.l.b16 %v66
  %v358 = vunpack.c.l.b16 %v67
  %v359 = vunpack.c.l.b16 %v68
  %v360 = vunpack.c.l.b16 %v69
  %v361 = vunpack.c.l.b16 %v70
  %v362 = vunpack.c.l.b16 %v71
  %v363 = vunpack.c.l.b16 %v72
  %v364 = vunpack.c.l.b16 %v73
  %v365 = vunpack.c.l.b16 %v74
  %v366 = vunpack.c.l.b16 %v75
  %v367 = vunpack.c.l.b16 %v76
  %v368 = vunpack.c.l.b16 %v77
  %v369 = vunpack.c.l.b16 %v78
  %v370 = vunpack.c.l.b16 %v79
  %v371 = vunpack.c.l.b16 %v80
  %v372 = vunpack.c.l.b16 %v81
  %v373 = vunpack.c.l.b16 %v82
  %v374 = vunpack.c.l.b16 %v83
  %v375 = vunpack.c.l.b16 %v84
  %v376 = vunpack.c.l.b16 %v85
  %v377 = vunpack.c.l.b16 %v86
  %v378 = vunpack.c.l.b16 %v87
  %v379 = vunpack.c.l.b16 %v88
  %v380 = vunpack.c.l.b16 %v89
  %v381 = vunpack.c.l.b16 %v90
  %v382 = vunpack.c.l.b16 %v91
  %v383 = vunpack.c.l.b16 %v92
  %v384 = vunpack.c.l.b16 %v93
  %v385 = vunpack.c.l.b16 %v94
  %v386 = vunpack.c.l.b16 %v95
  %v387 = vunpack.c.l.b16 %v96
  %v388 = vunpack.c.l.b16 %v97
  %v389 = vunpack.c.l.b16 %v98
  %v390 = vunpack.c.l.b16 %v99
  %v391 = vunpack.c.l.b16 %v100
  %v392 = vunpack.c.l.b16 %v101
  %v393 = vunpack.c.l.b16 %v102
  %v394 = vunpack.c.l.b16 %v103
  %v395 = vunpack.c.l.b16 %v104
  %v396 = vunpack.c.l.b16 %v105
  %v397 = vunpack.c.l.b16 %v106
  %v398 = vunpack.c.l.b16 %v107
  %v399 = vunpack.c.l.b16 %v108
  %v400 = vunpack.c.l.b16 %v109
  %v401 = vunpack.c.l.b16 %v110
  %v402 = vunpack.c.l.b16 %v111
  %v403 = vunpack.c.l.b16 %v112
  %v404 = vunpack.c.l.b16 %v113
  %v405 = vunpack.c.l.b16 %v114
  %v406 = vunpack.c.l.b16 %v115
  %v407 = vunpack.c.l.b16 %v116
  %v408 = vunpack.c.l.b16 %v117
  %v409 = vunpack.c.l.b16 %v118
  %v410 = vunpack.c.l.b16 %v119
  %v411 = vunpack.c.l.b16 %v120
  %v412 = vunpack.c.l.b16 %v121
  %v413 = vunpack.c.l.b16 %v122
  %v414 = vunpack.c.l.b16 %v123
  %v415 = vunpack.c.l.b16 %v124
  %v416 = vunpack.c.l.b16 %v125
  %v417 = vunpack.c.l.b16 %v126
  %v418 = vunpack.c.l.b16 %v127
  %v419 = vunpack.c.l.b16 %v128
  %v420 = vunpack.c.l.b16 %v129
  %v421 = vunpack.c.l.b16 %v130
  %v422 = vunpack.c.l.b16 %v131
  %v423 = vunpack.c.l.b16 %v132
  %v424 = vunpack.c.l.b16 %v133
  %v425 = vunpack.c.l.b16 %v134
  %v426 = vunpack.c.l.b16 %v135
  %v427 = vunpack.c.l.b16 %v136
  %v428 = vunpack.c.l.b16 %v137
  %v429 = vunpack.c.l.b16 %v138
  %v430 = vunpack.c.l.b16 %v139
  %v431 = vunpack.c.l.b16 %v140
  %v432 = vunpack.c.l.b16 %v141
  %v433 = vunpack.c.l.b16 %v142
  %v434 = vunpack.c.l.b16 %v143
  %v435 = vunpack.c.l.b16 %v144
  %v436 = vunpack.c.l.b16 %v145
  %v437 = vunpack.c.l.b16 %v146
  %v438 = vunpack.c.l.b16 %v147
  %v439 = vunpack.c.l.b16 %v148
  %v440 = vunpack.c.l.b16 %v149
  %v441 = vunpack.c.l.b16 %v150
  %v442 = vunpack.c.l.b16 %v151
  %v443 = vunpack.c.l.b16 %v152
  %v444 = vunpack.c.l.b16 %v153
  %v445 = vunpack.c.l.b16 %v154
  %v446 = vunpack.c.l.b16 %v155
  %v447 = vunpack.c.l.b16 %v156
  %v448 = vunpack.c.l.b16 %v157
  %v449 = vunpack.c.l.b16 %v158
  %v450 = vunpack.c.l.b16 %v159
  %v451 = vunpack.c.l.b16 %v160
  %v452 = vunpack.c.l.b16 %v161
  %v453 = vunpack.c.l.b16 %v162
  %v454 = vunpack.c.l.b16 %v163
  %v455 = vunpack.c.l.b16 %v164
  %v456 = vunpack.c.l.b16 %v165
  %v457 = vunpack.c.l.b16 %v166
  %v458 = vpack.c.b16 %v331, %v330
  %v459 = vpack.c.b16 %v333, %v332
  %v460 = vpack.c.b16 %v335, %v334
  %v461 = vpack.c.b16 %v337, %v336
  %v462 = vpack.c.b16 %v339, %v338
  %v463 = vpack.c.b16 %v341, %v340
  %v464 = vpack.c.b16 %v343, %v342
  %v465 = vpack.c.b16 %v345, %v344
  %v466 = vpack.c.b16 %v347, %v346
  %v467 = vpack.c.b16 %v349, %v348
  %v468 = vpack.c.b16 %v351, %v350
  %v469 = vpack.c.b16 %v353, %v352
  %v470 = vpack.c.b16 %v355, %v354
  %v471 = vpack.c.b16 %v357, %v356
  %v472 = vpack.c.b16 %v359, %v358
  %v473 = vpack.c.b16 %v361, %v360
  %v474 = vpack.c.b16 %v363, %v362
  %v475 = vpack.c.b16 %v365, %v364
  %v476 = vpack.c.b16 %v367, %v366
  %v477 = vpack.c.b16 %v369, %v368
  %v478 = vpack.c.b16 %v371, %v370
  %v479 = vpack.c.b16 %v373, %v372
  %v480 = vpack.c.b16 %v375, %v374
  %v481 = vpack.c.b16 %v377, %v376
  %v482 = vpack.c.b16 %v379, %v378
  %v483 = vpack.c.b16 %v381, %v380
  %v484 = vpack.c.b16 %v383, %v382
  %v485 = vpack.c.b16 %v385, %v384
  %v486 = vpack.c.b16 %v387, %v386
  %v487 = vpack.c.b16 %v389, %v388
  %v488 = vpack.c.b16 %v391, %v390
  %v489 = vpack.c.b16 %v393, %v392
  %v490 = vpack.c.b16 %v395, %v394
  %v491 = vpack.c.b16 %v397, %v396
  %v492 = vpack.c.b16 %v399, %v398
  %v493 = vpack.c.b16 %v401, %v400
  %v494 = vpack.c.b16 %v403, %v402
  %v495 = vpack.c.b16 %v405, %v404
  %v496 = vpack.c.b16 %v407, %v406
  %v497 = vpack.c.b16 %v409, %v408
  %v498 = vpack.c.b16 %v411, %v410
  %v499 = vpack.c.b16 %v413, %v412
  %v500 = vpack.c.b16 %v415, %v414
  %v501 = vpack.c.b16 %v417, %v416
  %v502 = vpack.c.b16 %v419, %v418
  %v503 = vpack.c.b16 %v421, %v420
  %v504 = vpack.c.b16 %v423, %v422
  %v505 = vpack.c.b16 %v425, %v424
  %v506 = vpack.c.b16 %v427, %v426
  %v507 = vpack.c.b16 %v429, %v428
  %v508 = vpack.c.b16 %v431, %v430
  %v509 = vpack.c.b16 %v433, %v432
  %v510 = vpack.c.b16 %v435, %v434
  %v511 = vpack.c.b16 %v437, %v436
  %v512 = vpack.c.b16 %v439, %v438
  %v513 = vpack.c.b16 %v441, %v440
  %v514 = vpack.c.b16 %v443, %v442
  %v515 = vpack.c.b16 %v445, %v444
  %v516 = vpack.c.b16 %v447, %v446
  %v517 = vpack.c.b16 %v449, %v448
  %v518 = vpack.c.b16 %v451, %v450
  %v519 = vpack.c.b16 %v453, %v452
  %v520 = vpack.c.b16 %v455, %v454
  %v521 = vpack.c.b16 %v457, %v456
  %586 = vmatprep.subr.bf16.mxu0 0
  %587 = vmatpush1.bf16.msra.mxu0 %v458
  %588 = vmatprep.subr.bf16.mxu0 0
  %589 = vmatpush1.bf16.msra.mxu0 %v459
  %590 = vmatprep.subr.bf16.mxu0 0
  %591 = vmatpush1.bf16.msra.mxu0 %v460
  %592 = vmatprep.subr.bf16.mxu0 0
  %593 = vmatpush1.bf16.msra.mxu0 %v461
  %594 = vmatprep.subr.bf16.mxu0 0
  %595 = vmatpush1.bf16.msra.mxu0 %v462
  %596 = vmatprep.subr.bf16.mxu0 0
  %597 = vmatpush1.bf16.msra.mxu0 %v463
  %598 = vmatprep.subr.bf16.mxu0 0
  %599 = vmatpush1.bf16.msra.mxu0 %v464
  %600 = vmatprep.subr.bf16.mxu0 0
  %601 = vmatpush1.bf16.msra.mxu0 %v465
  %602 = vmatprep.subr.bf16.mxu0 0
  %603 = vmatpush1.bf16.msra.mxu0 %v466
  %604 = vmatprep.subr.bf16.mxu0 0
  %605 = vmatpush1.bf16.msra.mxu0 %v467
  %606 = vmatprep.subr.bf16.mxu0 0
  %607 = vmatpush1.bf16.msra.mxu0 %v468
  %608 = vmatprep.subr.bf16.mxu0 0
  %609 = vmatpush1.bf16.msra.mxu0 %v469
  %610 = vmatprep.subr.bf16.mxu0 0
  %611 = vmatpush1.bf16.msra.mxu0 %v470
  %612 = vmatprep.subr.bf16.mxu0 0
  %613 = vmatpush1.bf16.msra.mxu0 %v471
  %614 = vmatprep.subr.bf16.mxu0 0
  %615 = vmatpush1.bf16.msra.mxu0 %v472
  %616 = vmatprep.subr.bf16.mxu0 0
  %617 = vmatpush1.bf16.msra.mxu0 %v473
  %618 = vmatprep.mubr.bf16.mxu0 %v187
  %619 = vmatmul.mubr.bf16.gmra.mrb[0].mxu0 %v186
  %v620 = vpop.f32.mrb[0].mxu0
  %v621 = vadd.f32 %v172, %v620
  %v622 = vpop.f32.mrb[0].mxu0
  %v623 = vpop.f32.mrb[0].mxu0
  %v624 = vpop.f32.mrb[0].mxu0
  %625 = vdwg.mxu0
  %626 = vmatprep.subr.bf16.mxu0 0
  %627 = vmatpush1.bf16.msra.mxu0 %v474
  %628 = vmatprep.subr.bf16.mxu0 0
  %629 = vmatpush1.bf16.msra.mxu0 %v475
  %630 = vmatprep.subr.bf16.mxu0 0
  %631 = vmatpush1.bf16.msra.mxu0 %v476
  %632 = vmatprep.subr.bf16.mxu0 0
  %633 = vmatpush1.bf16.msra.mxu0 %v477
  %634 = vmatprep.subr.bf16.mxu0 0
  %635 = vmatpush1.bf16.msra.mxu0 %v478
  %636 = vmatprep.subr.bf16.mxu0 0
  %637 = vmatpush1.bf16.msra.mxu0 %v479
  %638 = vmatprep.subr.bf16.mxu0 0
  %639 = vmatpush1.bf16.msra.mxu0 %v480
  %640 = vmatprep.subr.bf16.mxu0 0
  %641 = vmatpush1.bf16.msra.mxu0 %v481
  %642 = vmatprep.subr.bf16.mxu0 0
  %643 = vmatpush1.bf16.msra.mxu0 %v482
  %644 = vmatprep.subr.bf16.mxu0 0
  %645 = vmatpush1.bf16.msra.mxu0 %v483
  %646 = vmatprep.subr.bf16.mxu0 0
  %647 = vmatpush1.bf16.msra.mxu0 %v484
  %648 = vmatprep.subr.bf16.mxu0 0
  %649 = vmatpush1.bf16.msra.mxu0 %v485
  %650 = vmatprep.subr.bf16.mxu0 0
  %651 = vmatpush1.bf16.msra.mxu0 %v486
  %652 = vmatprep.subr.bf16.mxu0 0
  %653 = vmatpush1.bf16.msra.mxu0 %v487
  %654 = vmatprep.subr.bf16.mxu0 0
  %655 = vmatpush1.bf16.msra.mxu0 %v488
  %656 = vmatprep.subr.bf16.mxu0 0
  %657 = vmatpush1.bf16.msra.mxu0 %v489
  %658 = vmatprep.mubr.bf16.mxu0 %v189
  %659 = vmatmul.mubr.bf16.gmra.mrb[0].mxu0 %v188
  %v660 = vpop.f32.mrb[0].mxu0
  %v661 = vadd.f32 %v621, %v660
  %v662 = vpop.f32.mrb[0].mxu0
  %v663 = vpop.f32.mrb[0].mxu0
  %v664 = vpop.f32.mrb[0].mxu0
  %665 = vdwg.mxu0
  %666 = vmatprep.subr.bf16.mxu0 0
  %667 = vmatpush1.bf16.msra.mxu0 %v490
  %668 = vmatprep.subr.bf16.mxu0 0
  %669 = vmatpush1.bf16.msra.mxu0 %v491
  %670 = vmatprep.subr.bf16.mxu0 0
  %671 = vmatpush1.bf16.msra.mxu0 %v492
  %672 = vmatprep.subr.bf16.mxu0 0
  %673 = vmatpush1.bf16.msra.mxu0 %v493
  %674 = vmatprep.subr.bf16.mxu0 0
  %675 = vmatpush1.bf16.msra.mxu0 %v494
  %676 = vmatprep.subr.bf16.mxu0 0
  %677 = vmatpush1.bf16.msra.mxu0 %v495
  %678 = vmatprep.subr.bf16.mxu0 0
  %679 = vmatpush1.bf16.msra.mxu0 %v496
  %680 = vmatprep.subr.bf16.mxu0 0
  %681 = vmatpush1.bf16.msra.mxu0 %v497
  %682 = vmatprep.subr.bf16.mxu0 0
  %683 = vmatpush1.bf16.msra.mxu0 %v498
  %684 = vmatprep.subr.bf16.mxu0 0
  %685 = vmatpush1.bf16.msra.mxu0 %v499
  %686 = vmatprep.subr.bf16.mxu0 0
  %687 = vmatpush1.bf16.msra.mxu0 %v500
  %688 = vmatprep.subr.bf16.mxu0 0
  %689 = vmatpush1.bf16.msra.mxu0 %v501
  %690 = vmatprep.subr.bf16.mxu0 0
  %691 = vmatpush1.bf16.msra.mxu0 %v502
  %692 = vmatprep.subr.bf16.mxu0 0
  %693 = vmatpush1.bf16.msra.mxu0 %v503
  %694 = vmatprep.subr.bf16.mxu0 0
  %695 = vmatpush1.bf16.msra.mxu0 %v504
  %696 = vmatprep.subr.bf16.mxu0 0
  %697 = vmatpush1.bf16.msra.mxu0 %v505
  %698 = vmatprep.mubr.bf16.mxu0 %v191
  %699 = vmatmul.mubr.bf16.gmra.mrb[0].mxu0 %v190
  %v700 = vpop.f32.mrb[0].mxu0
  %v701 = vadd.f32 %v661, %v700
  %v702 = vpop.f32.mrb[0].mxu0
  %v703 = vpop.f32.mrb[0].mxu0
  %v704 = vpop.f32.mrb[0].mxu0
  %705 = vdwg.mxu0
  %706 = vmatprep.subr.bf16.mxu0 0
  %707 = vmatpush1.bf16.msra.mxu0 %v506
  %708 = vmatprep.subr.bf16.mxu0 0
  %709 = vmatpush1.bf16.msra.mxu0 %v507
  %710 = vmatprep.subr.bf16.mxu0 0
  %711 = vmatpush1.bf16.msra.mxu0 %v508
  %712 = vmatprep.subr.bf16.mxu0 0
  %713 = vmatpush1.bf16.msra.mxu0 %v509
  %714 = vmatprep.subr.bf16.mxu0 0
  %715 = vmatpush1.bf16.msra.mxu0 %v510
  %716 = vmatprep.subr.bf16.mxu0 0
  %717 = vmatpush1.bf16.msra.mxu0 %v511
  %718 = vmatprep.subr.bf16.mxu0 0
  %719 = vmatpush1.bf16.msra.mxu0 %v512
  %720 = vmatprep.subr.bf16.mxu0 0
  %721 = vmatpush1.bf16.msra.mxu0 %v513
  %722 = vmatprep.subr.bf16.mxu0 0
  %723 = vmatpush1.bf16.msra.mxu0 %v514
  %724 = vmatprep.subr.bf16.mxu0 0
  %725 = vmatpush1.bf16.msra.mxu0 %v515
  %726 = vmatprep.subr.bf16.mxu0 0
  %727 = vmatpush1.bf16.msra.mxu0 %v516
  %728 = vmatprep.subr.bf16.mxu0 0
  %729 = vmatpush1.bf16.msra.mxu0 %v517
  %730 = vmatprep.subr.bf16.mxu0 0
  %731 = vmatpush1.bf16.msra.mxu0 %v518
  %732 = vmatprep.subr.bf16.mxu0 0
  %733 = vmatpush1.bf16.msra.mxu0 %v519
  %734 = vmatprep.subr.bf16.mxu0 0
  %735 = vmatpush1.bf16.msra.mxu0 %v520
  %736 = vmatprep.subr.bf16.mxu0 0
  %737 = vmatpush1.bf16.msra.mxu0 %v521
  %738 = vmatprep.mubr.bf16.mxu0 %v193
  %739 = vmatmul.mubr.bf16.gmra.mrb[0].mxu0 %v192
  %v740 = vpop.f32.mrb[0].mxu0
  %v741 = vadd.f32 %v701, %v740
  %v742 = vpop.f32.mrb[0].mxu0
  %v743 = vpop.f32.mrb[0].mxu0
  %v744 = vpop.f32.mrb[0].mxu0
  %745 = vdwg.mxu0
  %s746 = sld [smem:[#allocation2]]
  %vm747 = vcmp.ge.f32.partialorder %v741, 0.0
  %v748 = vstv %s746
  %v749 = vmul.f32 %v748, %v741
  %v750 = vsel %vm747, %v741, %v749
  %v751 = vld [vmem:[%s3] sm:$0xff]
  %v752 = vld [vmem:[%s3 + $0x8] sm:$0xff]
  %v753 = vld [vmem:[%s3 + $0x10] sm:$0xff]
  %v754 = vld [vmem:[%s3 + $0x18] sm:$0xff]
  %v755 = vld [vmem:[%s4] sm:$0x1]
  %v757 = vlaneseq
  %v758 = vshrl.u32 %v757, 7
  %v759 = vsub.s32 0, %v758
  %v760 = vrot.slane %v755, %v759
  %vm762 = vcmask 261120
  %v764 = vsel %vm762, %v750, 0
  %766 = vmatprep.subr.mxu0 0.0
  %767 = vmatpush1.msra.mxu0 %v751
  %768 = vmatprep.subr.mxu0 0.0
  %769 = vmatpush1.msra.mxu0 %v752
  %770 = vmatprep.subr.mxu0 0.0
  %771 = vmatpush1.msra.mxu0 %v753
  %772 = vmatprep.subr.mxu0 0.0
  %773 = vmatpush1.msra.mxu0 %v754
  %774 = vmatprep.subr.mxu0 0.0
  %775 = vmatpush1.msra.mxu0 0.0
  %776 = vmatprep.subr.mxu0 0.0
  %777 = vmatpush1.msra.mxu0 0.0
  %778 = vmatprep.subr.mxu0 0.0
  %779 = vmatpush1.msra.mxu0 0.0
  %780 = vmatprep.subr.mxu0 0.0
  %781 = vmatpush1.msra.mxu0 0.0
  %782 = vmatprep.subr.mxu0 0.0
  %783 = vmatpush1.msra.mxu0 0.0
  %784 = vmatprep.subr.mxu0 0.0
  %785 = vmatpush1.msra.mxu0 0.0
  %786 = vmatprep.subr.mxu0 0.0
  %787 = vmatpush1.msra.mxu0 0.0
  %788 = vmatprep.subr.mxu0 0.0
  %789 = vmatpush1.msra.mxu0 0.0
  %790 = vmatprep.subr.mxu0 0.0
  %791 = vmatpush1.msra.mxu0 0.0
  %792 = vmatprep.subr.mxu0 0.0
  %793 = vmatpush1.msra.mxu0 0.0
  %794 = vmatprep.subr.mxu0 0.0
  %795 = vmatpush1.msra.mxu0 0.0
  %796 = vmatprep.subr.mxu0 0.0
  %797 = vmatpush1.msra.mxu0 0.0
  %798 = vmatprep.subr.mxu0 0.0
  %799 = vmatpush1.msra.mxu0 0.0
  %800 = vmatprep.subr.mxu0 0.0
  %801 = vmatpush1.msra.mxu0 0.0
  %802 = vmatprep.subr.mxu0 0.0
  %803 = vmatpush1.msra.mxu0 0.0
  %804 = vmatprep.subr.mxu0 0.0
  %805 = vmatpush1.msra.mxu0 0.0
  %806 = vmatprep.subr.mxu0 0.0
  %807 = vmatpush1.msra.mxu0 0.0
  %808 = vmatprep.subr.mxu0 0.0
  %809 = vmatpush1.msra.mxu0 0.0
  %810 = vmatprep.subr.mxu0 0.0
  %811 = vmatpush1.msra.mxu0 0.0
  %812 = vmatprep.subr.mxu0 0.0
  %813 = vmatpush1.msra.mxu0 0.0
  %814 = vmatprep.subr.mxu0 0.0
  %815 = vmatpush1.msra.mxu0 0.0
  %816 = vmatprep.subr.mxu0 0.0
  %817 = vmatpush1.msra.mxu0 0.0
  %818 = vmatprep.subr.mxu0 0.0
  %819 = vmatpush1.msra.mxu0 0.0
  %820 = vmatprep.subr.mxu0 0.0
  %821 = vmatpush1.msra.mxu0 0.0
  %822 = vmatprep.subr.mxu0 0.0
  %823 = vmatpush1.msra.mxu0 0.0
  %824 = vmatprep.subr.mxu0 0.0
  %825 = vmatpush1.msra.mxu0 0.0
  %826 = vmatprep.subr.mxu0 0.0
  %827 = vmatpush1.msra.mxu0 0.0
  %828 = vmatprep.subr.mxu0 0.0
  %829 = vmatpush1.msra.mxu0 0.0
  %830 = vmatprep.mubr.f32.mxu0 0.0
  %831 = vmatmul.mubr.f32.gmra.mrb[0].mxu0 %v764
  %v832 = vpop.f32.mrb[0].mxu0
  %v833 = vadd.f32 %v760, %v832
  %v834 = vpop.f32.mrb[0].mxu0
  %835 = vdwg.mxu0
  %s836 = sld [smem:[#allocation3]]
  %vm837 = vcmp.ge.f32.partialorder %v833, 0.0
  %v838 = vstv %s836
  %v839 = vmul.f32 %v838, %v833
  %v840 = vsel %vm837, %v833, %v839
  %v841 = vld [vmem:[%s5] sm:$0x1]
  %843 = vset.pattern.permute.xlu0 0
  %844 = vperm.xlu0 %843, %v840
  %v845 = vpop.permute.xlu0 %844
  %v847 = vlaneseq
  %v848 = vshrl.u32 %v847, 7
  %v849 = vsub.s32 0, %v848
  %v850 = vrot.slane %v841, %v849
  %v851 = vmul.f32 %v845, %v850
  %v852 = vld [vmem:[%s5 + $0x1] sm:$0x1]
  %853 = vset.pattern.permute.xlu0 1
  %854 = vperm.xlu0 %853, %v840
  %v855 = vpop.permute.xlu0 %854
  %v857 = vlaneseq
  %v858 = vshrl.u32 %v857, 7
  %v859 = vsub.s32 0, %v858
  %v860 = vrot.slane %v852, %v859
  %v861 = vmul.f32 %v855, %v860
  %v862 = vadd.f32 %v851, %v861
  %v863 = vld [vmem:[%s6] sm:$0x1]
  %v865 = vlaneseq
  %v866 = vshrl.u32 %v865, 7
  %v867 = vsub.s32 0, %v866
  %v868 = vrot.slane %v863, %v867
  %v870 = vadd.f32 %v862, %v868
  %vm871 = vcmask 64512
  %v872 = vsel %vm871, %v870, -inf
  %873 = vmax.xlane.f32.xlu0 %v872
  %v874 = vpop.xlane.xlu0 %873
  %v875 = vsub.f32 %v870, %v874
  %v876 = vmul.f32 %v875, 1.442695
  %v877 = vpow.pop %v876
  %v878 = vsel %vm871, %v877, 0.0
  %879 = vadd.xlane.f32.xlu0 %v878
  %v880 = vpop.xlane.xlu0 %879
  %v881 = vlog2.pop %v880
  %v882 = vmul.f32 %v881, 0.6931472
  %v883 = vsub.f32 %v875, %v882
  %884 = vst.msk [vmem:[%s9] sm:$0xff] %vm871, %v883
  // Predicated region
  $region38: #{classification_net_mine.1} parent=0 // pred_check
    _
  $region39: #{classification_net_mine.1} parent=0 // pred_check_branch
    %886 = sbr.rel (0) target = $region41
  $region40: #{classification_net_mine.1} parent=0 // pred_region
    _
  $region41: #{classification_net_mine.1} parent=0 // pred_fallthru
    _
  // Predicated region
  $region42: #{classification_net_mine.1} parent=0 // pred_check
    _
  $region43: #{classification_net_mine.1} parent=0 // pred_check_branch
    %888 = sbr.rel (0) target = $region45
  $region44: #{classification_net_mine.1} parent=0 // pred_region
    _
  $region45: #{classification_net_mine.1} parent=0 // pred_fallthru
    _

</llo_original>
